<compile_context>
chip_gen: v5e
topology: v5e:2x2
jax: 0.10.0
libtpu: 0.0.40
codegen_flags: <defaults>
</compile_context>

<pallas_src>
import functools

import jax
import jax.numpy as jnp
from jax.experimental import pallas as pl
from jax.experimental.pallas import tpu as pltpu

HIDDEN = 32        # hidden_size (small, per instructions)
OUTPUT_SIZE = 48   # output_size (vocab)
MAX_LENGTH = 10    # max_length

H, V, L = HIDDEN, OUTPUT_SIZE, MAX_LENGTH
G = 3 * H          # fused GRU gate width (r | z | n)
LANES = 128

# ---- packed weight-slab row offsets (all multiples of 8 -> aligned static slices) ----
R_EPRE = 0         # rows [  0, 32): [attn_we | comb_we]      (H, L+H)   emb-only pre-pass
R_HFUSE = 32       # rows [ 32, 64): [attn_wh | Whr|Whz|Whn]  (H, L+3H)  fused h-dot
R_COMBA = 64       # rows [ 64, 96): attn_combine applied-part (H, H)
R_WI = 96          # rows [ 96,128): GRU W_ih^T, gates r|z|n packed along lanes (H, 3H)
R_WOUT = 128       # rows [128,160): out Linear(H->V)^T
R_B_EPRE = 160     # bias rows, each on its own 8-row-aligned tile
R_B_H = 168
R_B_I = 176
R_B_OUT = 184
W_ROWS = 192

# ---- packed output lane layout: [ logp | h_new | attn_w | pad ] ----
O_LOGP = 0         # lanes [ 0, 48)
O_H = V            # lanes [48, 80)
O_ATTN = V + H     # lanes [80, 90)


def _fused_decode_kernel(T, row_emb, row_enc, act_ref, w_ref, out_ref):
    """T AttnDecoderRNN.forward steps (eval mode), fully fused in one invocation.

    act_ref : (A, 128) f32  row 0: h0 | rows row_emb..: embedded tokens | rows row_enc..: encoder_outputs
    w_ref   : (W_ROWS, 128) f32 packed weight/bias slab (DMA'd into VMEM once)
    out_ref : (T, 128) f32 packed per-step outputs, written once at the end
    """
    f32 = jnp.float32

    # ---- weights: static, sublane-aligned slices of the VMEM slab (loaded once) ----
    w_epre = w_ref[R_EPRE:R_EPRE + H, 0:L + H]           # [attn_we | comb_we]       (H, L+H)
    b_epre = w_ref[R_B_EPRE:R_B_EPRE + 1, 0:L + H]       # [attn_b  | comb_b ]       (1, L+H)
    w_hf = w_ref[R_HFUSE:R_HFUSE + H, 0:L + G]           # [attn_wh | W_hh r|z|n]    (H, L+3H)
    b_h = w_ref[R_B_H:R_B_H + 1, 0:G]                    # [b_hr|b_hz|b_hn]          (1, 3H)
    w_ca = w_ref[R_COMBA:R_COMBA + H, 0:H]               # attn_combine applied-part (H, H)
    w_wi = w_ref[R_WI:R_WI + H, 0:G]                     # [W_ir|W_iz|W_in]          (H, 3H)
    b_i = w_ref[R_B_I:R_B_I + 1, 0:G]                    # (1, 3H)
    w_out = w_ref[R_WOUT:R_WOUT + H, 0:V]                # (H, V)
    b_out = w_ref[R_B_OUT:R_B_OUT + 1, 0:V]              # (1, V)

    # ---- activations ----
    h = act_ref[0:1, 0:H]                                # (1, H) initial hidden
    emb = act_ref[row_emb:row_emb + T, 0:H]              # (T, H) embedded tokens (dropout==identity)
    enc = act_ref[row_enc:row_enc + L, 0:H]              # (L, H) encoder outputs

    # ---- batched pre-pass: embedding-only parts of attn & attn_combine, all T steps ----
    pre = jnp.dot(emb, w_epre, preferred_element_type=f32) + b_epre       # (T, L+H)

    # ---- recurrence, statically unrolled; hidden carried as a value (vreg-resident) ----
    h_rows, aw_rows = [], []
    for t in range(T):
        hf = jnp.dot(h, w_hf, preferred_element_type=f32)                 # (1, L+3H) fused h-dot
        # attn_weights = softmax(attn(cat(embedded, hidden)))
        logits = pre[t:t + 1, 0:L] + hf[:, 0:L]                           # (1, L)
        m = jnp.max(logits, axis=1, keepdims=True)
        e = jnp.exp(logits - m)
        aw = e * pl.reciprocal(jnp.sum(e, axis=1, keepdims=True), approx=True)
        # attn_applied = attn_weights @ encoder_outputs
        applied = jnp.dot(aw, enc, preferred_element_type=f32)            # (1, H)
        # x = relu(attn_combine(cat(embedded, attn_applied)))
        x = jnp.maximum(
            pre[t:t + 1, L:L + H] + jnp.dot(applied, w_ca, preferred_element_type=f32),
            0.0)                                                          # (1, H)
        # single-step GRU cell, gates fused along lanes (r | z | n)
        gi = jnp.dot(x, w_wi, preferred_element_type=f32) + b_i           # (1, 3H)
        gh = hf[:, L:L + G] + b_h                                         # (1, 3H)
        r = jax.nn.sigmoid(gi[:, 0:H] + gh[:, 0:H])
        z = jax.nn.sigmoid(gi[:, H:2 * H] + gh[:, H:2 * H])
        n = jnp.tanh(gi[:, 2 * H:G] + r * gh[:, 2 * H:G])
        h = (1.0 - z) * n + z * h                                         # (1, H)
        h_rows.append(h)
        aw_rows.append(aw)

    h_stack = jnp.concatenate(h_rows, axis=0)                             # (T, H)
    aw_stack = jnp.concatenate(aw_rows, axis=0)                           # (T, L)

    # ---- batched post-pass: log_softmax(out(h_t)) for all T steps at once ----
    o = jnp.dot(h_stack, w_out, preferred_element_type=f32) + b_out       # (T, V)
    om = jnp.max(o, axis=1, keepdims=True)
    lse = jnp.log(jnp.sum(jnp.exp(o - om), axis=1, keepdims=True)) + om
    logp = o - lse                                                        # (T, V)

    # ---- single lane-dense full-width writeback: [ logp | h | attn_w | pad ] ----
    pad = jnp.zeros((T, LANES - (V + H + L)), f32)
    out_ref[...] = jnp.concatenate([logp, h_stack, aw_stack, pad], axis=1)


def make_params(key, hidden=HIDDEN, output_size=OUTPUT_SIZE, max_length=MAX_LENGTH):
    ks = jax.random.split(key, 16)
    s = 0.1
    p = {
        "emb":      jax.random.normal(ks[0], (output_size, hidden), jnp.float32) * s,
        # attn: Linear(2H -> L); stored split & transposed: [emb-part, hidden-part]
        "attn_we":  jax.random.normal(ks[1], (hidden, max_length), jnp.float32) * s,
        "attn_wh":  jax.random.normal(ks[2], (hidden, max_length), jnp.float32) * s,
        "attn_b":   jax.random.normal(ks[3], (1, max_length), jnp.float32) * s,
        # attn_combine: Linear(2H -> H); split & transposed
        "comb_we":  jax.random.normal(ks[4], (hidden, hidden), jnp.float32) * s,
        "comb_wa":  jax.random.normal(ks[5], (hidden, hidden), jnp.float32) * s,
        "comb_b":   jax.random.normal(ks[6], (1, hidden), jnp.float32) * s,
        # GRU weights, split per gate (r, z, n), transposed
        "wir": jax.random.normal(ks[7],  (hidden, hidden), jnp.float32) * s,
        "wiz": jax.random.normal(ks[8],  (hidden, hidden), jnp.float32) * s,
        "win": jax.random.normal(ks[9],  (hidden, hidden), jnp.float32) * s,
        "whr": jax.random.normal(ks[10], (hidden, hidden), jnp.float32) * s,
        "whz": jax.random.normal(ks[11], (hidden, hidden), jnp.float32) * s,
        "whn": jax.random.normal(ks[12], (hidden, hidden), jnp.float32) * s,
        "bir": jax.random.normal(ks[13], (1, hidden), jnp.float32) * s,
        "biz": jax.random.normal(ks[14], (1, hidden), jnp.float32) * s,
        "bin": jax.random.normal(ks[15], (1, hidden), jnp.float32) * s,
        "bhr": jnp.zeros((1, hidden), jnp.float32),
        "bhz": jnp.zeros((1, hidden), jnp.float32),
        "bhn": jnp.zeros((1, hidden), jnp.float32),
        # out: Linear(H -> V), transposed
        "outw": jax.random.normal(jax.random.fold_in(key, 99), (hidden, output_size), jnp.float32) * s,
        "outb": jnp.zeros((1, output_size), jnp.float32),
    }
    return p


def pack_weights(p):
    """Pack every weight/bias (pre-transposed to (in, out)) into one tile-aligned f32 slab."""
    w = jnp.zeros((W_ROWS, LANES), jnp.float32)
    # pre-pass block: [attn_we | comb_we]
    w = w.at[R_EPRE:R_EPRE + H, 0:L].set(p["attn_we"])
    w = w.at[R_EPRE:R_EPRE + H, L:L + H].set(p["comb_we"])
    # fused h block: [attn_wh | W_hr | W_hz | W_hn]
    w = w.at[R_HFUSE:R_HFUSE + H, 0:L].set(p["attn_wh"])
    w = w.at[R_HFUSE:R_HFUSE + H, L:L + H].set(p["whr"])
    w = w.at[R_HFUSE:R_HFUSE + H, L + H:L + 2 * H].set(p["whz"])
    w = w.at[R_HFUSE:R_HFUSE + H, L + 2 * H:L + 3 * H].set(p["whn"])
    # attn_combine applied-part
    w = w.at[R_COMBA:R_COMBA + H, 0:H].set(p["comb_wa"])
    # GRU input weights [W_ir | W_iz | W_in]
    w = w.at[R_WI:R_WI + H, 0:H].set(p["wir"])
    w = w.at[R_WI:R_WI + H, H:2 * H].set(p["wiz"])
    w = w.at[R_WI:R_WI + H, 2 * H:3 * H].set(p["win"])
    # output projection
    w = w.at[R_WOUT:R_WOUT + H, 0:V].set(p["outw"])
    # bias rows
    w = w.at[R_B_EPRE, 0:L].set(p["attn_b"][0])
    w = w.at[R_B_EPRE, L:L + H].set(p["comb_b"][0])
    w = w.at[R_B_H, 0:H].set(p["bhr"][0])
    w = w.at[R_B_H, H:2 * H].set(p["bhz"][0])
    w = w.at[R_B_H, 2 * H:3 * H].set(p["bhn"][0])
    w = w.at[R_B_I, 0:H].set(p["bir"][0])
    w = w.at[R_B_I, H:2 * H].set(p["biz"][0])
    w = w.at[R_B_I, 2 * H:3 * H].set(p["bin"][0])
    w = w.at[R_B_OUT, 0:V].set(p["outb"][0])
    return w


def attn_decoder_decode(tokens, hidden, encoder_outputs, p, w_packed=None):
    """Run T teacher-forced decoder steps in ONE un-gridded pallas_call.

    tokens: (T,) int32; hidden: (1,1,H); encoder_outputs: (L,H).
    Returns (logp (T,V), final hidden (1,1,H), attn_weights (T,L), per-step hiddens (T,H)).
    """
    T = int(tokens.shape[0])
    assert encoder_outputs.shape == (L, H)
    if w_packed is None:
        w_packed = pack_weights(p)

    row_emb = 8                                  # emb rows start (sublane-tile aligned)
    row_enc = row_emb + max(8, -(-T // 8) * 8)   # encoder_outputs rows start (aligned)
    a_rows = row_enc + 16                        # L=10 padded to 16 rows

    # Wrapper-side embedding gather: only the needed rows are shipped.
    emb_rows = jnp.take(p["emb"], tokens, axis=0).astype(jnp.float32)   # (T, H)

    act = jnp.zeros((a_rows, LANES), jnp.float32)
    act = act.at[0, 0:H].set(hidden.reshape(H))
    act = act.at[row_emb:row_emb + T, 0:H].set(emb_rows)
    act = act.at[row_enc:row_enc + L, 0:H].set(encoder_outputs.astype(jnp.float32))

    kernel = functools.partial(_fused_decode_kernel, T, row_emb, row_enc)

    out = pl.pallas_call(
        kernel,
        out_shape=jax.ShapeDtypeStruct((T, LANES), jnp.float32),
        in_specs=[
            pl.BlockSpec(memory_space=pltpu.MemorySpace.VMEM),   # activation slab (once)
            pl.BlockSpec(memory_space=pltpu.MemorySpace.VMEM),   # weight slab (once)
        ],
        out_specs=pl.BlockSpec(memory_space=pltpu.MemorySpace.VMEM),
    )(act, w_packed)

    logp = out[:, O_LOGP:O_LOGP + V]
    hiddens = out[:, O_H:O_H + H]
    attn_w = out[:, O_ATTN:O_ATTN + L]
    final_h = hiddens[T - 1].reshape(1, 1, H)
    return logp, final_h, attn_w, hiddens


def attn_decoder_forward(token, hidden, encoder_outputs, p, w_packed=None):
    """Single AttnDecoderRNN.forward: token (1,1) int32, hidden (1,1,H), enc (L,H)."""
    logp, new_h, attn_w, _ = attn_decoder_decode(
        token.reshape(-1).astype(jnp.int32), hidden, encoder_outputs, p, w_packed)
    return logp, new_h, attn_w


def reference_forward(token, hidden, encoder_outputs, p):
    """Pure-JAX reference mirroring the PyTorch module (eval mode)."""
    emb = p["emb"][token[0, 0]][None, :]                 # (1,H)
    h = hidden[0]                                        # (1,H)
    logits = emb @ p["attn_we"] + h @ p["attn_wh"] + p["attn_b"]
    aw = jax.nn.softmax(logits, axis=1)
    applied = aw @ encoder_outputs
    x = jax.nn.relu(emb @ p["comb_we"] + applied @ p["comb_wa"] + p["comb_b"])
    r = jax.nn.sigmoid(x @ p["wir"] + p["bir"] + h @ p["whr"] + p["bhr"])
    z = jax.nn.sigmoid(x @ p["wiz"] + p["biz"] + h @ p["whz"] + p["bhz"])
    n = jnp.tanh(x @ p["win"] + p["bin"] + r * (h @ p["whn"] + p["bhn"]))
    h_new = (1.0 - z) * n + z * h
    logp = jax.nn.log_softmax(h_new @ p["outw"] + p["outb"], axis=1)
    return logp, h_new.reshape(1, 1, -1), aw


if __name__ == "__main__":
    key = jax.random.PRNGKey(0)
    kp, kh, ke, kt = jax.random.split(key, 4)

    params = make_params(kp)
    w_packed = pack_weights(params)

    hidden0 = jax.random.normal(kh, (1, 1, HIDDEN), jnp.float32) * 0.1
    encoder_outputs = jax.random.normal(ke, (MAX_LENGTH, HIDDEN), jnp.float32) * 0.1

    # Tolerances slightly relaxed vs bit-tight f32: the softmax denominator uses the
    # EUP approximate reciprocal (pl.reciprocal(..., approx=True)).
    RTOL, ATOL = 5e-3, 5e-4

    # ---- single-step forward (exactly the module's forward signature) ----
    token = jnp.array([[jax.random.randint(kt, (), 0, OUTPUT_SIZE)]], dtype=jnp.int32)
    logp, new_h, attn_w = attn_decoder_forward(token, hidden0, encoder_outputs, params, w_packed)
    jax.block_until_ready((logp, new_h, attn_w))

    ref_logp, ref_h, ref_aw = reference_forward(token, hidden0, encoder_outputs, params)
    assert jnp.allclose(logp, ref_logp, rtol=RTOL, atol=ATOL)
    assert jnp.allclose(new_h, ref_h, rtol=RTOL, atol=ATOL)
    assert jnp.allclose(attn_w, ref_aw, rtol=RTOL, atol=ATOL)

    # ---- fused multi-step decode: T forwards in a single un-gridded pallas_call ----
    T = 6
    tokens = jax.random.randint(jax.random.fold_in(key, 7), (T,), 0, OUTPUT_SIZE, dtype=jnp.int32)
    logps, fin_h, aws, hs = attn_decoder_decode(tokens, hidden0, encoder_outputs, params, w_packed)
    jax.block_until_ready((logps, fin_h, aws, hs))

    h_ref = hidden0
    for t in range(T):
        r_logp, h_ref, r_aw = reference_forward(tokens[t].reshape(1, 1), h_ref,
                                                encoder_outputs, params)
        assert jnp.allclose(logps[t:t + 1], r_logp, rtol=RTOL, atol=ATOL)
        assert jnp.allclose(aws[t:t + 1], r_aw, rtol=RTOL, atol=ATOL)
        assert jnp.allclose(hs[t:t + 1], h_ref.reshape(1, HIDDEN), rtol=RTOL, atol=ATOL)
    assert jnp.allclose(fin_h, h_ref, rtol=RTOL, atol=ATOL)

    print("KERNEL_OK")
</pallas_src>

<mosaic_0001>
module attributes {stable_mosaic.version = 11 : i64} {
  func.func @_fused_decode_kernel(%arg0: memref<32x128xf32, #tpu.memory_space<vmem>>, %arg1: memref<192x128xf32, #tpu.memory_space<vmem>>, %arg2: memref<1x128xf32, #tpu.memory_space<vmem>>) attributes {dimension_semantics = [], scalar_prefetch = 0 : i64, scratch_operands = 0 : i64, tpu.core_type = #tpu.core_type<tc>} {
    %c0 = arith.constant 0 : index
    %c0_0 = arith.constant 0 : index
    %0 = vector.load %arg1[%c0, %c0_0] : memref<192x128xf32, #tpu.memory_space<vmem>>, vector<32x42xf32>
    %c160 = arith.constant 160 : index
    %c0_1 = arith.constant 0 : index
    %1 = vector.load %arg1[%c160, %c0_1] : memref<192x128xf32, #tpu.memory_space<vmem>>, vector<1x42xf32>
    %c32 = arith.constant 32 : index
    %c0_2 = arith.constant 0 : index
    %2 = vector.load %arg1[%c32, %c0_2] : memref<192x128xf32, #tpu.memory_space<vmem>>, vector<32x106xf32>
    %c168 = arith.constant 168 : index
    %c0_3 = arith.constant 0 : index
    %3 = vector.load %arg1[%c168, %c0_3] : memref<192x128xf32, #tpu.memory_space<vmem>>, vector<1x96xf32>
    %c64 = arith.constant 64 : index
    %c0_4 = arith.constant 0 : index
    %4 = vector.load %arg1[%c64, %c0_4] : memref<192x128xf32, #tpu.memory_space<vmem>>, vector<32x32xf32>
    %c96 = arith.constant 96 : index
    %c0_5 = arith.constant 0 : index
    %5 = vector.load %arg1[%c96, %c0_5] : memref<192x128xf32, #tpu.memory_space<vmem>>, vector<32x96xf32>
    %c176 = arith.constant 176 : index
    %c0_6 = arith.constant 0 : index
    %6 = vector.load %arg1[%c176, %c0_6] : memref<192x128xf32, #tpu.memory_space<vmem>>, vector<1x96xf32>
    %c128 = arith.constant 128 : index
    %c0_7 = arith.constant 0 : index
    %7 = vector.load %arg1[%c128, %c0_7] : memref<192x128xf32, #tpu.memory_space<vmem>>, vector<32x48xf32>
    %c184 = arith.constant 184 : index
    %c0_8 = arith.constant 0 : index
    %8 = vector.load %arg1[%c184, %c0_8] : memref<192x128xf32, #tpu.memory_space<vmem>>, vector<1x48xf32>
    %c0_9 = arith.constant 0 : index
    %c0_10 = arith.constant 0 : index
    %9 = vector.load %arg0[%c0_9, %c0_10] : memref<32x128xf32, #tpu.memory_space<vmem>>, vector<1x32xf32>
    %c8 = arith.constant 8 : index
    %c0_11 = arith.constant 0 : index
    %10 = vector.load %arg0[%c8, %c0_11] : memref<32x128xf32, #tpu.memory_space<vmem>>, vector<1x32xf32>
    %c16 = arith.constant 16 : index
    %c0_12 = arith.constant 0 : index
    %11 = vector.load %arg0[%c16, %c0_12] : memref<32x128xf32, #tpu.memory_space<vmem>>, vector<10x32xf32>
    %cst = arith.constant dense<0.000000e+00> : vector<1x42xf32>
    %12 = tpu.matmul %10, %0, %cst {dimension_numbers = #tpu.dot_dimension_numbers<[1], [0], [0], [1], [0, 0, 1, 1], [], []>} : vector<1x32xf32>, vector<32x42xf32>, vector<1x42xf32> -> vector<1x42xf32>
    %13 = arith.addf %12, %1 : vector<1x42xf32>
    %cst_13 = arith.constant dense<0.000000e+00> : vector<1x106xf32>
    %14 = tpu.matmul %9, %2, %cst_13 {dimension_numbers = #tpu.dot_dimension_numbers<[1], [0], [0], [1], [0, 0, 1, 1], [], []>} : vector<1x32xf32>, vector<32x106xf32>, vector<1x106xf32> -> vector<1x106xf32>
    %15 = vector.extract_strided_slice %13 {offsets = [0, 0], sizes = [1, 10], strides = [1, 1]} : vector<1x42xf32> to vector<1x10xf32>
    %16 = vector.extract_strided_slice %14 {offsets = [0, 0], sizes = [1, 10], strides = [1, 1]} : vector<1x106xf32> to vector<1x10xf32>
    %17 = arith.addf %15, %16 : vector<1x10xf32>
    %cst_14 = arith.constant dense<0xFF800000> : vector<1xf32>
    %18 = vector.multi_reduction <maximumf>, %17, %cst_14 [1] : vector<1x10xf32> to vector<1xf32>
    %19 = vector.shape_cast %18 : vector<1xf32> to vector<1x1xf32>
    %20 = vector.broadcast %19 : vector<1x1xf32> to vector<1x10xf32>
    %21 = arith.subf %17, %20 : vector<1x10xf32>
    %22 = math.exp %21 : vector<1x10xf32>
    %cst_15 = arith.constant dense<0.000000e+00> : vector<1xf32>
    %23 = vector.multi_reduction <add>, %22, %cst_15 [1] : vector<1x10xf32> to vector<1xf32>
    %24 = vector.shape_cast %23 : vector<1xf32> to vector<1x1xf32>
    %25 = tpu.reciprocal %24 {approx = true} : vector<1x1xf32> -> vector<1x1xf32>
    %26 = vector.broadcast %25 : vector<1x1xf32> to vector<1x10xf32>
    %27 = arith.mulf %22, %26 : vector<1x10xf32>
    %cst_16 = arith.constant dense<0.000000e+00> : vector<1x32xf32>
    %28 = tpu.matmul %27, %11, %cst_16 {dimension_numbers = #tpu.dot_dimension_numbers<[1], [0], [0], [1], [0, 0, 1, 1], [], []>} : vector<1x10xf32>, vector<10x32xf32>, vector<1x32xf32> -> vector<1x32xf32>
    %29 = vector.extract_strided_slice %13 {offsets = [0, 10], sizes = [1, 32], strides = [1, 1]} : vector<1x42xf32> to vector<1x32xf32>
    %cst_17 = arith.constant dense<0.000000e+00> : vector<1x32xf32>
    %30 = tpu.matmul %28, %4, %cst_17 {dimension_numbers = #tpu.dot_dimension_numbers<[1], [0], [0], [1], [0, 0, 1, 1], [], []>} : vector<1x32xf32>, vector<32x32xf32>, vector<1x32xf32> -> vector<1x32xf32>
    %31 = arith.addf %29, %30 : vector<1x32xf32>
    %cst_18 = arith.constant 0.000000e+00 : f32
    %32 = vector.broadcast %cst_18 : f32 to vector<1x32xf32>
    %33 = arith.maximumf %31, %32 : vector<1x32xf32>
    %cst_19 = arith.constant dense<0.000000e+00> : vector<1x96xf32>
    %34 = tpu.matmul %33, %5, %cst_19 {dimension_numbers = #tpu.dot_dimension_numbers<[1], [0], [0], [1], [0, 0, 1, 1], [], []>} : vector<1x32xf32>, vector<32x96xf32>, vector<1x96xf32> -> vector<1x96xf32>
    %35 = arith.addf %34, %6 : vector<1x96xf32>
    %36 = vector.extract_strided_slice %14 {offsets = [0, 10], sizes = [1, 96], strides = [1, 1]} : vector<1x106xf32> to vector<1x96xf32>
    %37 = arith.addf %36, %3 : vector<1x96xf32>
    %38 = vector.extract_strided_slice %35 {offsets = [0, 0], sizes = [1, 32], strides = [1, 1]} : vector<1x96xf32> to vector<1x32xf32>
    %39 = vector.extract_strided_slice %37 {offsets = [0, 0], sizes = [1, 32], strides = [1, 1]} : vector<1x96xf32> to vector<1x32xf32>
    %40 = arith.addf %38, %39 : vector<1x32xf32>
    %41 = arith.negf %40 : vector<1x32xf32>
    %42 = math.exp %41 : vector<1x32xf32>
    %cst_20 = arith.constant 1.000000e+00 : f32
    %43 = vector.broadcast %cst_20 : f32 to vector<1x32xf32>
    %44 = arith.addf %43, %42 : vector<1x32xf32>
    %45 = arith.divf %43, %44 : vector<1x32xf32>
    %46 = vector.extract_strided_slice %35 {offsets = [0, 32], sizes = [1, 32], strides = [1, 1]} : vector<1x96xf32> to vector<1x32xf32>
    %47 = vector.extract_strided_slice %37 {offsets = [0, 32], sizes = [1, 32], strides = [1, 1]} : vector<1x96xf32> to vector<1x32xf32>
    %48 = arith.addf %46, %47 : vector<1x32xf32>
    %49 = arith.negf %48 : vector<1x32xf32>
    %50 = math.exp %49 : vector<1x32xf32>
    %cst_21 = arith.constant 1.000000e+00 : f32
    %51 = vector.broadcast %cst_21 : f32 to vector<1x32xf32>
    %52 = arith.addf %51, %50 : vector<1x32xf32>
    %53 = arith.divf %51, %52 : vector<1x32xf32>
    %54 = vector.extract_strided_slice %35 {offsets = [0, 64], sizes = [1, 32], strides = [1, 1]} : vector<1x96xf32> to vector<1x32xf32>
    %55 = vector.extract_strided_slice %37 {offsets = [0, 64], sizes = [1, 32], strides = [1, 1]} : vector<1x96xf32> to vector<1x32xf32>
    %56 = arith.mulf %45, %55 : vector<1x32xf32>
    %57 = arith.addf %54, %56 : vector<1x32xf32>
    %58 = math.tanh %57 : vector<1x32xf32>
    %cst_22 = arith.constant 1.000000e+00 : f32
    %59 = vector.broadcast %cst_22 : f32 to vector<1x32xf32>
    %60 = arith.subf %59, %53 : vector<1x32xf32>
    %61 = arith.mulf %60, %58 : vector<1x32xf32>
    %62 = arith.mulf %53, %9 : vector<1x32xf32>
    %63 = arith.addf %61, %62 : vector<1x32xf32>
    %cst_23 = arith.constant dense<0.000000e+00> : vector<1x48xf32>
    %64 = tpu.matmul %63, %7, %cst_23 {dimension_numbers = #tpu.dot_dimension_numbers<[1], [0], [0], [1], [0, 0, 1, 1], [], []>} : vector<1x32xf32>, vector<32x48xf32>, vector<1x48xf32> -> vector<1x48xf32>
    %65 = arith.addf %64, %8 : vector<1x48xf32>
    %cst_24 = arith.constant dense<0xFF800000> : vector<1xf32>
    %66 = vector.multi_reduction <maximumf>, %65, %cst_24 [1] : vector<1x48xf32> to vector<1xf32>
    %67 = vector.shape_cast %66 : vector<1xf32> to vector<1x1xf32>
    %68 = vector.broadcast %67 : vector<1x1xf32> to vector<1x48xf32>
    %69 = arith.subf %65, %68 : vector<1x48xf32>
    %70 = math.exp %69 : vector<1x48xf32>
    %cst_25 = arith.constant dense<0.000000e+00> : vector<1xf32>
    %71 = vector.multi_reduction <add>, %70, %cst_25 [1] : vector<1x48xf32> to vector<1xf32>
    %72 = vector.shape_cast %71 : vector<1xf32> to vector<1x1xf32>
    %73 = math.log %72 : vector<1x1xf32>
    %74 = arith.addf %73, %67 : vector<1x1xf32>
    %75 = vector.broadcast %74 : vector<1x1xf32> to vector<1x48xf32>
    %76 = arith.subf %65, %75 : vector<1x48xf32>
    %cst_26 = arith.constant 0.000000e+00 : f32
    %77 = vector.broadcast %cst_26 : f32 to vector<1x38xf32>
    %78 = tpu.concatenate %76, %63, %27, %77 in 1 : vector<1x48xf32>, vector<1x32xf32>, vector<1x10xf32>, vector<1x38xf32> -> vector<1x128xf32>
    %c0_27 = arith.constant 0 : index
    %c0_28 = arith.constant 0 : index
    %79 = vector.load %arg2[%c0_27, %c0_28] : memref<1x128xf32, #tpu.memory_space<vmem>>, vector<1x128xf32>
    tpu.vector_store %arg2[%c0_27, %c0_28], %78 {strides = array<i32>} : memref<1x128xf32, #tpu.memory_space<vmem>>, vector<1x128xf32>,
    return
  }
}

</mosaic_0001>

<llo_original>
// kernel: tpu_custom_call.1
$region0: #{tpu_custom_call.1}
  #allocation0 [shape = 'u32[]', space=smem, size = 0x4, offset = 0x4, fixed_abs, tag = 'smem constant byte address 0x4 - core index']
  #allocation1 [shape = 'u32[72,128]{1,0:T(1,128)}', space=vmem, size = 0x9000, scoped, tag = 'internal scratch']
  %s0 = inlined_call_operand.hbm [shape: f32[32,128], index: 0, kind: input, shape index: {}]
  %s1 = inlined_call_operand.hbm [shape: f32[192,128], index: 1, kind: input, shape index: {}]
  %s2 = inlined_call_operand.hbm [shape: f32[1,128], index: 2, kind: output, shape index: {}]
  %s3 = sld [smem:[#allocation0]]
  $region26: #{tpu_custom_call.1} parent=0
    _
  %s5 = ssub.s32 1, %s3
  %s6 = scalar_select 0, %s5, %s3
  $region1: #{tpu_custom_call.1} parent=0
    #allocation2 [shape = 'u8[16384]{0}', space=vmem, size = 0x4000, scoped, tag = 'input window, operand 0, single buffered']
    #allocation3 [shape = 's32[1]{0}', space=sflag, size = 0x4, scoped, tag = 'scoped memory for tpu_custom_call.1']
    #allocation4 [shape = 's32[1]{0}', space=sflag, size = 0x4, scoped, tag = 'scoped memory for tpu_custom_call.1']
    #allocation5 [shape = 'u8[98304]{0}', space=vmem, size = 0x18000, scoped, tag = 'input window, operand 1, single buffered']
    #allocation6 [shape = 's32[1]{0}', space=sflag, size = 0x4, scoped, tag = 'scoped memory for tpu_custom_call.1']
    #allocation7 [shape = 'u8[512]{0}', space=vmem, size = 0x400, scoped, tag = 'output window, operand 0, single buffered']
    %7 = vsyncpa [#allocation3], 0
    %8 = vsyncpa [#allocation6], 0
    %9 = vsyncpa [#allocation4], 0
    // Predicated region
    $region2: #{tpu_custom_call.1} parent=1 // pred_check
      _
    $region3: #{tpu_custom_call.1} parent=1 // pred_check_branch
      %11 = sbr.rel (0) target = $region5
    $region4: #{tpu_custom_call.1} parent=1 // pred_region
      %13 = vsyncadd [#allocation3], 0
      %s14 = sshll.u32 %s0, 4
      %s15 = int_to_ptr.hbm [resolvable:$true] %s14
      %s16 = sshll.u32 [#allocation2], 4
      %s17 = int_to_ptr.vmem [resolvable:$true] %s16
      %22 = dma.hbm_to_vmem [thread:$0]  %s15, 512, %s17, [#allocation3], 128, 128, 8
    $region5: #{tpu_custom_call.1} parent=1 // pred_fallthru
      _
    // Predicated region
    $region6: #{tpu_custom_call.1} parent=1 // pred_check
      _
    $region7: #{tpu_custom_call.1} parent=1 // pred_check_branch
      %24 = sbr.rel (0) target = $region9
    $region8: #{tpu_custom_call.1} parent=1 // pred_region
      %26 = vsyncadd [#allocation6], 0
      %s27 = sshll.u32 %s1, 4
      %s28 = int_to_ptr.hbm [resolvable:$true] %s27
      %s29 = sshll.u32 [#allocation5], 4
      %s30 = int_to_ptr.vmem [resolvable:$true] %s29
      %35 = dma.hbm_to_vmem [thread:$0]  %s28, 3072, %s30, [#allocation6], 128, 128, 8
    $region9: #{tpu_custom_call.1} parent=1 // pred_fallthru
      _
    // Predicated region
    $region10: #{tpu_custom_call.1} parent=1 // pred_check
      _
    $region11: #{tpu_custom_call.1} parent=1 // pred_check_branch
      %37 = sbr.rel (0) target = $region13
    $region12: #{tpu_custom_call.1} parent=1 // pred_region
      %39 = dma.done [#allocation3], 512
    $region13: #{tpu_custom_call.1} parent=1 // pred_fallthru
      _
    // Predicated region
    $region14: #{tpu_custom_call.1} parent=1 // pred_check
      _
    $region15: #{tpu_custom_call.1} parent=1 // pred_check_branch
      %41 = sbr.rel (0) target = $region17
    $region16: #{tpu_custom_call.1} parent=1 // pred_region
      %43 = dma.done [#allocation6], 3072
    $region17: #{tpu_custom_call.1} parent=1 // pred_fallthru
      _
    %v44 = vld [vmem:[#allocation5] sm:$0xff]
    %v45 = vld [vmem:[#allocation5 + $0x8] sm:$0xff]
    %v46 = vld [vmem:[#allocation5 + $0x10] sm:$0xff]
    %v47 = vld [vmem:[#allocation5 + $0x18] sm:$0xff]
    %v48 = vld [vmem:[#allocation5 + $0xa0] sm:$0x1]
    %v49 = vld [vmem:[#allocation5 + $0x20] sm:$0xff]
    %v50 = vld [vmem:[#allocation5 + $0x28] sm:$0xff]
    %v51 = vld [vmem:[#allocation5 + $0x30] sm:$0xff]
    %v52 = vld [vmem:[#allocation5 + $0x38] sm:$0xff]
    %v53 = vld [vmem:[#allocation5 + $0xa8] sm:$0x1]
    %v54 = vld [vmem:[#allocation5 + $0x40] sm:$0xff]
    %v55 = vld [vmem:[#allocation5 + $0x48] sm:$0xff]
    %v56 = vld [vmem:[#allocation5 + $0x50] sm:$0xff]
    %v57 = vld [vmem:[#allocation5 + $0x58] sm:$0xff]
    %v58 = vld [vmem:[#allocation5 + $0x60] sm:$0xff]
    %v59 = vld [vmem:[#allocation5 + $0x68] sm:$0xff]
    %v60 = vld [vmem:[#allocation5 + $0x70] sm:$0xff]
    %v61 = vld [vmem:[#allocation5 + $0x78] sm:$0xff]
    %v62 = vld [vmem:[#allocation5 + $0xb0] sm:$0x1]
    %v63 = vld [vmem:[#allocation5 + $0x80] sm:$0xff]
    %v64 = vld [vmem:[#allocation5 + $0x88] sm:$0xff]
    %v65 = vld [vmem:[#allocation5 + $0x90] sm:$0xff]
    %v66 = vld [vmem:[#allocation5 + $0x98] sm:$0xff]
    %v67 = vld [vmem:[#allocation5 + $0xb8] sm:$0x1]
    %v68 = vld [vmem:[#allocation2] sm:$0x1]
    %v69 = vld [vmem:[#allocation2 + $0x8] sm:$0x1]
    %v70 = vld [vmem:[#allocation2 + $0x10] sm:$0xff]
    %v71 = vld [vmem:[#allocation2 + $0x18] sm:$0x3]
    %vm72 = vcmask 261120
    %v74 = vsel %vm72, %v69, 0
    %76 = vmatpush.msra.mxu0 0.0
    %77 = vmatpush.msra.mxu0 0.0
    %78 = vmatpush.msra.mxu0 0.0
    %79 = vmatpush.msra.mxu0 0.0
    %80 = vmatpush.msra.mxu0 0.0
    %81 = vmatpush.msra.mxu0 0.0
    %82 = vmatpush.msra.mxu0 0.0
    %83 = vmatpush.msra.mxu0 0.0
    %84 = vmatpush.msra.mxu0 0.0
    %85 = vmatpush.msra.mxu0 0.0
    %86 = vmatpush.msra.mxu0 0.0
    %87 = vmatpush.msra.mxu0 0.0
    %88 = vmatpush.msra.mxu0 %v47
    %89 = vmatpush.msra.mxu0 %v46
    %90 = vmatpush.msra.mxu0 %v45
    %91 = vmatpush.msra.mxu0 %v44
    %92 = vmatmul.f32.gmra.mxu0 %v74
    %v93 = vpop.f32.mrf.mxu0
    %v94 = vadd.f32 %v48, %v93
    %95 = vdwg.mxu0
    %v97 = vsel %vm72, %v68, 0
    %99 = vmatpush.msra.mxu0 0.0
    %100 = vmatpush.msra.mxu0 0.0
    %101 = vmatpush.msra.mxu0 0.0
    %102 = vmatpush.msra.mxu0 0.0
    %103 = vmatpush.msra.mxu0 0.0
    %104 = vmatpush.msra.mxu0 0.0
    %105 = vmatpush.msra.mxu0 0.0
    %106 = vmatpush.msra.mxu0 0.0
    %107 = vmatpush.msra.mxu0 0.0
    %108 = vmatpush.msra.mxu0 0.0
    %109 = vmatpush.msra.mxu0 0.0
    %110 = vmatpush.msra.mxu0 0.0
    %111 = vmatpush.msra.mxu0 %v52
    %112 = vmatpush.msra.mxu0 %v51
    %113 = vmatpush.msra.mxu0 %v50
    %114 = vmatpush.msra.mxu0 %v49
    %115 = vmatmul.f32.gmra.mxu0 %v97
    %v116 = vpop.f32.mrf.mxu0
    %v117 = vadd.f32 0.0, %v116
    %118 = vdwg.mxu0
    %v119 = vadd.f32 %v94, %v117
    %vm120 = vcmask 73728
    %v121 = vsel %vm120, %v119, -inf
    %122 = vmax.xlane.f32.xlu0 %v121
    %v123 = vpop.xlane.xlu0 %122
    %v124 = vsub.f32 %v119, %v123
    %v125 = vmul.f32 %v124, 1.442695
    %v126 = vpow.pop %v125
    %v127 = vsel %vm120, %v126, 0.0
    %128 = vadd.xlane.f32.xlu0 %v127
    %v129 = vpop.xlane.xlu0 %128
    %v130 = vrcp.pop %v129
    %v131 = vmul.f32 %v126, %v130
    %vm132 = vcmask 80896
    %v134 = vsel %vm132, %v131, 0
    %vm136 = vcmask 1041408
    %v138 = vsel %vm136, %v71, 0
    %140 = vmatpush.msra.mxu0 0.0
    %141 = vmatpush.msra.mxu0 0.0
    %142 = vmatpush.msra.mxu0 0.0
    %143 = vmatpush.msra.mxu0 0.0
    %144 = vmatpush.msra.mxu0 0.0
    %145 = vmatpush.msra.mxu0 0.0
    %146 = vmatpush.msra.mxu0 0.0
    %147 = vmatpush.msra.mxu0 0.0
    %148 = vmatpush.msra.mxu0 0.0
    %149 = vmatpush.msra.mxu0 0.0
    %150 = vmatpush.msra.mxu0 0.0
    %151 = vmatpush.msra.mxu0 0.0
    %152 = vmatpush.msra.mxu0 0.0
    %153 = vmatpush.msra.mxu0 0.0
    %154 = vmatpush.msra.mxu0 %v138
    %155 = vmatpush.msra.mxu0 %v70
    %156 = vmatmul.f32.gmra.mxu0 %v134
    %v157 = vpop.f32.mrf.mxu0
    %v158 = vadd.f32 0.0, %v157
    %159 = vdwg.mxu0
    %v161 = vsel %vm72, %v158, 0
    %163 = vmatpush.msra.mxu0 0.0
    %164 = vmatpush.msra.mxu0 0.0
    %165 = vmatpush.msra.mxu0 0.0
    %166 = vmatpush.msra.mxu0 0.0
    %167 = vmatpush.msra.mxu0 0.0
    %168 = vmatpush.msra.mxu0 0.0
    %169 = vmatpush.msra.mxu0 0.0
    %170 = vmatpush.msra.mxu0 0.0
    %171 = vmatpush.msra.mxu0 0.0
    %172 = vmatpush.msra.mxu0 0.0
    %173 = vmatpush.msra.mxu0 0.0
    %174 = vmatpush.msra.mxu0 0.0
    %175 = vmatpush.msra.mxu0 %v57
    %176 = vmatpush.msra.mxu0 %v56
    %177 = vmatpush.msra.mxu0 %v55
    %178 = vmatpush.msra.mxu0 %v54
    %179 = vmatmul.f32.gmra.mxu0 %v161
    %v180 = vpop.f32.mrf.mxu0
    %v181 = vadd.f32 0.0, %v180
    %182 = vdwg.mxu0
    %184 = vrot.lane.b32.xlu0 %v181, 10
    %v185 = vpop.permute.xlu0 %184
    %v187 = vadd.f32 %v94, %v185
    %v188 = vmax.f32 %v187, 0.0
    %190 = vrot.lane.b32.xlu0 %v188, 118
    %v191 = vpop.permute.xlu0 %190
    %v192 = vsel %vm72, %v191, 0
    %194 = vmatpush.msra.mxu0 0.0
    %195 = vmatpush.msra.mxu0 0.0
    %196 = vmatpush.msra.mxu0 0.0
    %197 = vmatpush.msra.mxu0 0.0
    %198 = vmatpush.msra.mxu0 0.0
    %199 = vmatpush.msra.mxu0 0.0
    %200 = vmatpush.msra.mxu0 0.0
    %201 = vmatpush.msra.mxu0 0.0
    %202 = vmatpush.msra.mxu0 0.0
    %203 = vmatpush.msra.mxu0 0.0
    %204 = vmatpush.msra.mxu0 0.0
    %205 = vmatpush.msra.mxu0 0.0
    %206 = vmatpush.msra.mxu0 %v61
    %207 = vmatpush.msra.mxu0 %v60
    %208 = vmatpush.msra.mxu0 %v59
    %209 = vmatpush.msra.mxu0 %v58
    %210 = vmatmul.f32.gmra.mxu0 %v192
    %v211 = vpop.f32.mrf.mxu0
    %v212 = vadd.f32 %v62, %v211
    %213 = vdwg.mxu0
    %215 = vrot.lane.b32.xlu0 %v53, 10
    %v216 = vpop.permute.xlu0 %215
    %v218 = vadd.f32 %v117, %v216
    %220 = vrot.lane.b32.xlu0 %v218, 118
    %v221 = vpop.permute.xlu0 %220
    %v223 = vadd.f32 %v212, %v221
    %v224 = vxor.u32 %v223, 2147483648
    %v225 = vmul.f32 %v224, 1.442695
    %v226 = vpow.pop %v225
    %v227 = vadd.f32 %v226, 1.0
    %v228 = vrcp.pop %v227
    %v229 = vmul.f32 %v227, %v228
    %v230 = vsub.f32 1.0, %v229
    %v231 = vmul.f32 %v228, %v230
    %v232 = vadd.f32 %v228, %v231
    %vm233 = vweird.f32 %v227
    %vm234 = vweird.f32 %v228
    %vm235 = vmor %vm233, %vm234
    %v236 = vsel %vm235, %v228, %v232
    %v237 = vand.u32 2147483647, %v227
    %vm238 = vcmp.eq.f32.partialorder %v237, 8.507059e+37
    %v239 = vand.u32 %v227, 2147483648
    %v240 = vor.u32 1.1754944e-38, %v239
    %v241 = vsel %vm238, %v240, %v236
    %v242 = vmul.f32 1.0, %v241
    %243 = vrot.lane.b32.xlu0 %v218, 54
    %v244 = vpop.permute.xlu0 %243
    %v246 = vmul.f32 %v242, %v244
    %248 = vrot.lane.b32.xlu0 %v246, 64
    %v249 = vpop.permute.xlu0 %248
    %v251 = vadd.f32 %v212, %v249
    %v252 = vtanh.pop %v251
    %v253 = vsub.f32 1.0, %v242
    %255 = vrot.lane.b32.xlu0 %v252, 96
    %v256 = vpop.permute.xlu0 %255
    %v258 = vmul.f32 %v253, %v256
    %259 = vrot.lane.b32.xlu0 %v68, 32
    %v260 = vpop.permute.xlu0 %259
    %v262 = vmul.f32 %v242, %v260
    %v263 = vadd.f32 %v258, %v262
    %265 = vrot.lane.b32.xlu0 %v263, 96
    %v266 = vpop.permute.xlu0 %265
    %v267 = vsel %vm72, %v266, 0
    %269 = vmatpush.msra.mxu0 0.0
    %270 = vmatpush.msra.mxu0 0.0
    %271 = vmatpush.msra.mxu0 0.0
    %272 = vmatpush.msra.mxu0 0.0
    %273 = vmatpush.msra.mxu0 0.0
    %274 = vmatpush.msra.mxu0 0.0
    %275 = vmatpush.msra.mxu0 0.0
    %276 = vmatpush.msra.mxu0 0.0
    %277 = vmatpush.msra.mxu0 0.0
    %278 = vmatpush.msra.mxu0 0.0
    %279 = vmatpush.msra.mxu0 0.0
    %280 = vmatpush.msra.mxu0 0.0
    %281 = vmatpush.msra.mxu0 %v66
    %282 = vmatpush.msra.mxu0 %v65
    %283 = vmatpush.msra.mxu0 %v64
    %284 = vmatpush.msra.mxu0 %v63
    %285 = vmatmul.f32.gmra.mxu0 %v267
    %v286 = vpop.f32.mrf.mxu0
    %v287 = vadd.f32 %v67, %v286
    %288 = vdwg.mxu0
    %vm289 = vcmask 385024
    %v290 = vsel %vm289, %v287, -inf
    %291 = vmax.xlane.f32.xlu0 %v290
    %v292 = vpop.xlane.xlu0 %291
    %v293 = vsub.f32 %v287, %v292
    %v294 = vmul.f32 %v293, 1.442695
    %v295 = vpow.pop %v294
    %v296 = vsel %vm289, %v295, 0.0
    %297 = vadd.xlane.f32.xlu0 %v296
    %v298 = vpop.xlane.xlu0 %297
    %v299 = vlog2.pop %v298
    %v300 = vmul.f32 %v299, 0.6931472
    %v301 = vadd.f32 %v300, %v292
    %v302 = vsub.f32 %v287, %v301
    %303 = vrot.lane.b32.xlu0 %v263, 16
    %v304 = vpop.permute.xlu0 %303
    %306 = vrot.lane.b32.xlu0 %v131, 80
    %v307 = vpop.permute.xlu0 %306
    %vm309 = vcmask 392192
    %v310 = vsel %vm309, %v302, %v304
    %vm311 = vcmask 654336
    %v312 = vsel %vm311, %v310, %v307
    %vm313 = vcmask 736256
    %v314 = vsel %vm313, %v312, 0.0
    %315 = vst [vmem:[#allocation7] sm:$0x1] %v314
    // Predicated region
    $region18: #{tpu_custom_call.1} parent=1 // pred_check
      _
    $region19: #{tpu_custom_call.1} parent=1 // pred_check_branch
      %317 = sbr.rel (0) target = $region21
    $region20: #{tpu_custom_call.1} parent=1 // pred_region
      %319 = vsyncadd [#allocation4], 0
      %s321 = sshll.u32 [#allocation7], 4
      %s322 = int_to_ptr.vmem [resolvable:$true] %s321
      %s323 = sshll.u32 %s2, 4
      %s324 = int_to_ptr.hbm [resolvable:$true] %s323
      %326 = dma.vmem_to_hbm [thread:$0]  %s322, 16, %s324, [#allocation4]
    $region21: #{tpu_custom_call.1} parent=1 // pred_fallthru
      _
    // Predicated region
    $region22: #{tpu_custom_call.1} parent=1 // pred_check
      _
    $region23: #{tpu_custom_call.1} parent=1 // pred_check_branch
      %328 = sbr.rel (0) target = $region25
    $region24: #{tpu_custom_call.1} parent=1 // pred_region
      %330 = dma.done [#allocation4], 16
    $region25: #{tpu_custom_call.1} parent=1 // pred_fallthru
      _
    %331 = vsyncpa [#allocation3], 1
    %332 = vsyncpa [#allocation6], 1
    %333 = vsyncpa [#allocation4], 1

</llo_original>
